<compile_context>
chip_gen: v5e
topology: v5e:2x2
jax: 0.10.0
libtpu: 0.0.40
codegen_flags: <defaults>
</compile_context>

<pallas_src>
import jax
import jax.numpy as jnp
import numpy as np
from jax.experimental import pallas as pl
from jax.experimental.pallas import tpu as pltpu


def _round_up(x, m):
    return (x + m - 1) // m * m


def nncnn_kernel(x_ref, wc_ref, bc_ref, w1_ref, b1_ref, w2_ref, b2_ref, o_ref):
    # x_ref : (TB*L, K*C)   im2col rows, one per (batch, position), tap-major
    # wc_ref: (K*C, H)      conv weight  [k*C + c, out_ch]
    # bc_ref: (1, H)        conv bias
    # w1_ref: (P*H, HID)    fc1 weight, reordered to (pooled pos, channel)-major
    # b1_ref: (1, HID)
    # w2_ref: (HID, Opad)   fc2 weight, lanes zero-padded to Opad
    # b2_ref: (1, Opad)
    # o_ref : (TB, Opad)
    H = wc_ref.shape[1]
    PH, _ = w1_ref.shape
    P = PH // H
    L = 2 * P
    TB = x_ref.shape[0] // L

    # --- Conv1d('same') as a single im2col matmul + bias + ReLU ---
    h = jnp.dot(x_ref[...], wc_ref[...], preferred_element_type=jnp.float32)
    h = jnp.maximum(h + bc_ref[...], 0.0)                      # (TB*L, H)

    # --- MaxPool1d(2): pair adjacent positions, max, flatten per batch row ---
    pooled = jnp.max(h.reshape(TB, P, 2, H), axis=2)           # (TB, P, H)
    flat = pooled.reshape(TB, PH)                              # (TB, P*H), idx p*H + c

    # --- fc1 + ReLU (single dense matmul) ---
    # TODO(synk): nn.Dropout is identity in eval mode; no stochastic masking applied.
    a = jnp.maximum(
        jnp.dot(flat, w1_ref[...], preferred_element_type=jnp.float32)
        + b1_ref[...], 0.0)                                    # (TB, HID)

    # --- fc2 -> lane-dense store ---
    out = jnp.dot(a, w2_ref[...], preferred_element_type=jnp.float32) + b2_ref[...]
    o_ref[...] = out.astype(o_ref.dtype)


def nncnn_forward(x_ncl, params, kernel_size):
    """x_ncl: (B, C, L) exactly like the PyTorch module's input."""
    conv_w, conv_b, fc1_w, fc1_b, fc2_w, fc2_b = params
    B, C, L = x_ncl.shape
    H = conv_w.shape[0]          # hidden_dim (conv out channels)
    HID = fc1_w.shape[0]         # hidden_dim (fc1 out)
    O = fc2_w.shape[0]           # output_dim
    K = kernel_size
    assert K % 2 == 1, "padding=k//2 reproduces 'same' conv only for odd kernel_size"
    pad = K // 2
    P = L // 2
    assert fc1_w.shape[1] == H * P, "fc1 sizing requires sequence length == input_dim"

    # Batch blocking: fill the sublane axis; one grid step per TB batch rows.
    TB = min(_round_up(B, 8), 64)
    B_pad = _round_up(B, TB)
    Opad = _round_up(max(O, 128), 128)     # lane-dense output slab

    # ---- glue: layout / weight reorganisation (plain JAX, layout plumbing) ----
    x_nlc = jnp.transpose(x_ncl, (0, 2, 1)).astype(jnp.float32)      # (B, L, C)
    x_nlc = jnp.pad(x_nlc, ((0, B_pad - B), (pad, pad), (0, 0)))     # (B_pad, L+2p, C)
    # im2col: row (b, l) holds the K*C receptive field of output position l,
    # flattened tap-major (index = k*C + c).
    x_col = jnp.concatenate([x_nlc[:, dk:dk + L, :] for dk in range(K)], axis=2)
    x_col = x_col.reshape(B_pad * L, K * C)                          # (B_pad*L, K*C)

    wc = jnp.transpose(conv_w, (2, 1, 0)).reshape(K * C, H)          # [k*C + c, o]
    bc = conv_b.reshape(1, H)
    # fc1_w[o, c*P + p] -> w1[p*H + c, o]  (matches the kernel's (p, c) flatten)
    w1 = jnp.transpose(fc1_w.reshape(HID, H, P), (2, 1, 0)).reshape(P * H, HID)
    b1 = fc1_b.reshape(1, HID)
    w2 = jnp.pad(fc2_w.T, ((0, 0), (0, Opad - O)))                   # (HID, Opad)
    b2 = jnp.pad(fc2_b.reshape(1, O), ((0, 0), (0, Opad - O)))       # (1, Opad)

    out = pl.pallas_call(
        nncnn_kernel,
        out_shape=jax.ShapeDtypeStruct((B_pad, Opad), jnp.float32),
        grid=(B_pad // TB,),
        in_specs=[
            pl.BlockSpec((TB * L, K * C), lambda b: (b, 0)),
            pl.BlockSpec((K * C, H), lambda b: (0, 0)),
            pl.BlockSpec((1, H), lambda b: (0, 0)),
            pl.BlockSpec((P * H, HID), lambda b: (0, 0)),
            pl.BlockSpec((1, HID), lambda b: (0, 0)),
            pl.BlockSpec((HID, Opad), lambda b: (0, 0)),
            pl.BlockSpec((1, Opad), lambda b: (0, 0)),
        ],
        out_specs=pl.BlockSpec((TB, Opad), lambda b: (b, 0)),
        compiler_params=pltpu.CompilerParams(
            dimension_semantics=("parallel",)),
    )(x_col, wc, bc, w1, b1, w2, b2)
    return out[:B, :O]                                               # (B, O)


def nncnn_reference(x_ncl, params, kernel_size):
    """Pure-JAX reference matching PyTorch eval-mode semantics exactly."""
    conv_w, conv_b, fc1_w, fc1_b, fc2_w, fc2_b = params
    B, C, L = x_ncl.shape
    H = conv_w.shape[0]
    K = kernel_size
    pad = K // 2
    xp = jnp.pad(x_ncl, ((0, 0), (0, 0), (pad, pad)))
    conv = jnp.zeros((B, H, L), jnp.float32)
    for dk in range(K):
        conv = conv + jnp.einsum('oc,bct->bot', conv_w[:, :, dk], xp[:, :, dk:dk + L])
    conv = jax.nn.relu(conv + conv_b[None, :, None])
    pooled = jnp.max(conv.reshape(B, H, L // 2, 2), axis=-1)      # MaxPool1d(2)
    flat = pooled.reshape(B, -1)                                  # x.view(B, -1)
    a = jax.nn.relu(flat @ fc1_w.T + fc1_b)
    return a @ fc2_w.T + fc2_b


if __name__ == "__main__":
    # Module hyper-params (sequence length must equal input_dim for fc1 sizing)
    input_dim, output_dim, kernel_size, hidden_dim = 16, 4, 3, 32
    B, C, L = 2, input_dim, input_dim

    key = jax.random.PRNGKey(0)
    ks = jax.random.split(key, 7)
    params = (
        0.1 * jax.random.normal(ks[0], (hidden_dim, input_dim, kernel_size), jnp.float32),  # conv1.weight
        0.1 * jax.random.normal(ks[1], (hidden_dim,), jnp.float32),                         # conv1.bias
        0.1 * jax.random.normal(ks[2], (hidden_dim, hidden_dim * (input_dim // 2)), jnp.float32),  # fc1.weight
        0.1 * jax.random.normal(ks[3], (hidden_dim,), jnp.float32),                         # fc1.bias
        0.1 * jax.random.normal(ks[4], (output_dim, hidden_dim), jnp.float32),              # fc2.weight
        0.1 * jax.random.normal(ks[5], (output_dim,), jnp.float32),                         # fc2.bias
    )
    x = jax.random.normal(ks[6], (B, C, L), jnp.float32)  # PyTorch NCL input

    out = jax.block_until_ready(nncnn_forward(x, params, kernel_size))
    ref = nncnn_reference(x, params, kernel_size)
    np.testing.assert_allclose(np.asarray(out), np.asarray(ref), rtol=1e-4, atol=1e-5)
    print("KERNEL_OK")
</pallas_src>

<mosaic_0001>
module attributes {stable_mosaic.version = 11 : i64} {
  func.func @nncnn_kernel(%arg0: i32, %arg1: memref<128x48xf32, #tpu.memory_space<vmem>>, %arg2: memref<48x32xf32, #tpu.memory_space<vmem>>, %arg3: memref<1x32xf32, #tpu.memory_space<vmem>>, %arg4: memref<256x32xf32, #tpu.memory_space<vmem>>, %arg5: memref<1x32xf32, #tpu.memory_space<vmem>>, %arg6: memref<32x128xf32, #tpu.memory_space<vmem>>, %arg7: memref<1x128xf32, #tpu.memory_space<vmem>>, %arg8: memref<8x128xf32, #tpu.memory_space<vmem>>) attributes {dimension_semantics = [#tpu.dimension_semantics<parallel>], iteration_bounds = array<i64: 1>, scalar_prefetch = 0 : i64, scratch_operands = 0 : i64, tpu.core_type = #tpu.core_type<tc>, window_params = [{transform_indices = @transform_0, window_bounds = array<i64: 128, 48>}, {pipeline_mode = #tpu.pipeline_mode<synchronous>, transform_indices = @transform_1, window_bounds = array<i64: 48, 32>}, {pipeline_mode = #tpu.pipeline_mode<synchronous>, transform_indices = @transform_2, window_bounds = array<i64: 1, 32>}, {pipeline_mode = #tpu.pipeline_mode<synchronous>, transform_indices = @transform_3, window_bounds = array<i64: 256, 32>}, {pipeline_mode = #tpu.pipeline_mode<synchronous>, transform_indices = @transform_4, window_bounds = array<i64: 1, 32>}, {pipeline_mode = #tpu.pipeline_mode<synchronous>, transform_indices = @transform_5, window_bounds = array<i64: 32, 128>}, {pipeline_mode = #tpu.pipeline_mode<synchronous>, transform_indices = @transform_6, window_bounds = array<i64: 1, 128>}, {transform_indices = @transform_7, window_bounds = array<i64: 8, 128>}]} {
    %c0 = arith.constant 0 : index
    %c0_0 = arith.constant 0 : index
    %0 = vector.load %arg1[%c0, %c0_0] : memref<128x48xf32, #tpu.memory_space<vmem>>, vector<128x48xf32>
    %c0_1 = arith.constant 0 : index
    %c0_2 = arith.constant 0 : index
    %1 = vector.load %arg2[%c0_1, %c0_2] : memref<48x32xf32, #tpu.memory_space<vmem>>, vector<48x32xf32>
    %cst = arith.constant dense<0.000000e+00> : vector<128x32xf32>
    %2 = tpu.matmul %0, %1, %cst {dimension_numbers = #tpu.dot_dimension_numbers<[1], [0], [0], [1], [0, 0, 1, 1], [], []>} : vector<128x48xf32>, vector<48x32xf32>, vector<128x32xf32> -> vector<128x32xf32>
    %c0_3 = arith.constant 0 : index
    %c0_4 = arith.constant 0 : index
    %3 = vector.load %arg3[%c0_3, %c0_4] : memref<1x32xf32, #tpu.memory_space<vmem>>, vector<1x32xf32>
    %4 = vector.broadcast %3 : vector<1x32xf32> to vector<128x32xf32>
    %5 = arith.addf %2, %4 : vector<128x32xf32>
    %cst_5 = arith.constant 0.000000e+00 : f32
    %6 = vector.broadcast %cst_5 : f32 to vector<128x32xf32>
    %7 = arith.maximumf %5, %6 : vector<128x32xf32>
    %8 = vector.shape_cast %7 : vector<128x32xf32> to vector<8x8x2x32xf32>
    %cst_6 = arith.constant dense<0xFF800000> : vector<8x8x32xf32>
    %9 = vector.multi_reduction <maximumf>, %8, %cst_6 [2] : vector<8x8x2x32xf32> to vector<8x8x32xf32>
    %10 = vector.shape_cast %9 : vector<8x8x32xf32> to vector<8x256xf32>
    %c0_7 = arith.constant 0 : index
    %c0_8 = arith.constant 0 : index
    %11 = vector.load %arg4[%c0_7, %c0_8] : memref<256x32xf32, #tpu.memory_space<vmem>>, vector<256x32xf32>
    %cst_9 = arith.constant dense<0.000000e+00> : vector<8x32xf32>
    %12 = tpu.matmul %10, %11, %cst_9 {dimension_numbers = #tpu.dot_dimension_numbers<[1], [0], [0], [1], [0, 0, 1, 1], [], []>} : vector<8x256xf32>, vector<256x32xf32>, vector<8x32xf32> -> vector<8x32xf32>
    %c0_10 = arith.constant 0 : index
    %c0_11 = arith.constant 0 : index
    %13 = vector.load %arg5[%c0_10, %c0_11] : memref<1x32xf32, #tpu.memory_space<vmem>>, vector<1x32xf32>
    %14 = vector.broadcast %13 : vector<1x32xf32> to vector<8x32xf32>
    %15 = arith.addf %12, %14 : vector<8x32xf32>
    %cst_12 = arith.constant 0.000000e+00 : f32
    %16 = vector.broadcast %cst_12 : f32 to vector<8x32xf32>
    %17 = arith.maximumf %15, %16 : vector<8x32xf32>
    %c0_13 = arith.constant 0 : index
    %c0_14 = arith.constant 0 : index
    %18 = vector.load %arg6[%c0_13, %c0_14] : memref<32x128xf32, #tpu.memory_space<vmem>>, vector<32x128xf32>
    %cst_15 = arith.constant dense<0.000000e+00> : vector<8x128xf32>
    %19 = tpu.matmul %17, %18, %cst_15 {dimension_numbers = #tpu.dot_dimension_numbers<[1], [0], [0], [1], [0, 0, 1, 1], [], []>} : vector<8x32xf32>, vector<32x128xf32>, vector<8x128xf32> -> vector<8x128xf32>
    %c0_16 = arith.constant 0 : index
    %c0_17 = arith.constant 0 : index
    %20 = vector.load %arg7[%c0_16, %c0_17] : memref<1x128xf32, #tpu.memory_space<vmem>>, vector<1x128xf32>
    %21 = vector.broadcast %20 : vector<1x128xf32> to vector<8x128xf32>
    %22 = arith.addf %19, %21 : vector<8x128xf32>
    %c0_18 = arith.constant 0 : index
    %c0_19 = arith.constant 0 : index
    %23 = vector.load %arg8[%c0_18, %c0_19] : memref<8x128xf32, #tpu.memory_space<vmem>>, vector<8x128xf32>
    tpu.vector_store %arg8[%c0_18, %c0_19], %22 {strides = array<i32>} : memref<8x128xf32, #tpu.memory_space<vmem>>, vector<8x128xf32>,
    return
  }
  func.func @transform_0(%arg0: i32) -> (i32, i32) {
    %c0_i32 = arith.constant 0 : i32
    %c0_i32_0 = arith.constant 0 : i32
    return %arg0, %c0_i32 : i32, i32
  }
  func.func @transform_1(%arg0: i32) -> (i32, i32) {
    %c0_i32 = arith.constant 0 : i32
    %c0_i32_0 = arith.constant 0 : i32
    %c0_i32_1 = arith.constant 0 : i32
    return %c0_i32, %c0_i32_0 : i32, i32
  }
  func.func @transform_2(%arg0: i32) -> (i32, i32) {
    %c0_i32 = arith.constant 0 : i32
    %c0_i32_0 = arith.constant 0 : i32
    %c0_i32_1 = arith.constant 0 : i32
    return %c0_i32, %c0_i32_0 : i32, i32
  }
  func.func @transform_3(%arg0: i32) -> (i32, i32) {
    %c0_i32 = arith.constant 0 : i32
    %c0_i32_0 = arith.constant 0 : i32
    %c0_i32_1 = arith.constant 0 : i32
    return %c0_i32, %c0_i32_0 : i32, i32
  }
  func.func @transform_4(%arg0: i32) -> (i32, i32) {
    %c0_i32 = arith.constant 0 : i32
    %c0_i32_0 = arith.constant 0 : i32
    %c0_i32_1 = arith.constant 0 : i32
    return %c0_i32, %c0_i32_0 : i32, i32
  }
  func.func @transform_5(%arg0: i32) -> (i32, i32) {
    %c0_i32 = arith.constant 0 : i32
    %c0_i32_0 = arith.constant 0 : i32
    %c0_i32_1 = arith.constant 0 : i32
    return %c0_i32, %c0_i32_0 : i32, i32
  }
  func.func @transform_6(%arg0: i32) -> (i32, i32) {
    %c0_i32 = arith.constant 0 : i32
    %c0_i32_0 = arith.constant 0 : i32
    %c0_i32_1 = arith.constant 0 : i32
    return %c0_i32, %c0_i32_0 : i32, i32
  }
  func.func @transform_7(%arg0: i32) -> (i32, i32) {
    %c0_i32 = arith.constant 0 : i32
    %c0_i32_0 = arith.constant 0 : i32
    return %arg0, %c0_i32 : i32, i32
  }
}

</mosaic_0001>

<llo_original>
// kernel: tpu_custom_call.1
$region0: #{tpu_custom_call.1}
  #allocation0 [shape = 'u32[]', space=smem, size = 0x4, offset = 0x4, fixed_abs, tag = 'smem constant byte address 0x4 - core index']
  #allocation1 [shape = 'u32[72,128]{1,0:T(1,128)}', space=vmem, size = 0x9000, scoped, tag = 'internal scratch']
  %s0 = inlined_call_operand.vmem [shape: f32[128,48], index: 0, kind: input, shape index: {}]
  %s1 = inlined_call_operand.vmem [shape: f32[48,32], index: 1, kind: input, shape index: {}]
  %s2 = inlined_call_operand.vmem [shape: f32[1,32], index: 2, kind: input, shape index: {}]
  %s3 = inlined_call_operand.vmem [shape: f32[256,32], index: 3, kind: input, shape index: {}]
  %s4 = inlined_call_operand.vmem [shape: f32[1,32], index: 4, kind: input, shape index: {}]
  %s5 = inlined_call_operand.vmem [shape: f32[32,128], index: 5, kind: input, shape index: {}]
  %s6 = inlined_call_operand.vmem [shape: f32[1,128], index: 6, kind: input, shape index: {}]
  %s7 = inlined_call_operand.hbm [shape: f32[8,128], index: 7, kind: output, shape index: {}]
  %s8 = sld [smem:[#allocation0]]
  $region38: #{tpu_custom_call.1} parent=0
    _
  %s10 = ssub.s32 1, %s8
  %s11 = scalar_select 0, %s10, %s8
  $region1: #{tpu_custom_call.1} parent=0
    #allocation2 [shape = 'u8[4096]{0}', space=vmem, size = 0x1000, scoped, tag = 'output window, operand 0, single buffered']
    #allocation3 [shape = 's32[1]{0}', space=sflag, size = 0x4, scoped, tag = 'scoped memory for tpu_custom_call.1']
    %12 = vsyncpa [#allocation3], 0
    // Predicated region
    $region2: #{tpu_custom_call.1} parent=1 // pred_check
      _
    $region3: #{tpu_custom_call.1} parent=1 // pred_check_branch
      %14 = sbr.rel (0) target = $region5
    $region4: #{tpu_custom_call.1} parent=1 // pred_region
      _
    $region5: #{tpu_custom_call.1} parent=1 // pred_fallthru
      _
    // Predicated region
    $region6: #{tpu_custom_call.1} parent=1 // pred_check
      _
    $region7: #{tpu_custom_call.1} parent=1 // pred_check_branch
      %16 = sbr.rel (0) target = $region9
    $region8: #{tpu_custom_call.1} parent=1 // pred_region
      _
    $region9: #{tpu_custom_call.1} parent=1 // pred_fallthru
      _
    // Predicated region
    $region10: #{tpu_custom_call.1} parent=1 // pred_check
      _
    $region11: #{tpu_custom_call.1} parent=1 // pred_check_branch
      %18 = sbr.rel (0) target = $region13
    $region12: #{tpu_custom_call.1} parent=1 // pred_region
      _
    $region13: #{tpu_custom_call.1} parent=1 // pred_fallthru
      _
    // Predicated region
    $region14: #{tpu_custom_call.1} parent=1 // pred_check
      _
    $region15: #{tpu_custom_call.1} parent=1 // pred_check_branch
      %20 = sbr.rel (0) target = $region17
    $region16: #{tpu_custom_call.1} parent=1 // pred_region
      _
    $region17: #{tpu_custom_call.1} parent=1 // pred_fallthru
      _
    // Predicated region
    $region18: #{tpu_custom_call.1} parent=1 // pred_check
      _
    $region19: #{tpu_custom_call.1} parent=1 // pred_check_branch
      %22 = sbr.rel (0) target = $region21
    $region20: #{tpu_custom_call.1} parent=1 // pred_region
      _
    $region21: #{tpu_custom_call.1} parent=1 // pred_fallthru
      _
    // Predicated region
    $region22: #{tpu_custom_call.1} parent=1 // pred_check
      _
    $region23: #{tpu_custom_call.1} parent=1 // pred_check_branch
      %24 = sbr.rel (0) target = $region25
    $region24: #{tpu_custom_call.1} parent=1 // pred_region
      _
    $region25: #{tpu_custom_call.1} parent=1 // pred_fallthru
      _
    // Predicated region
    $region26: #{tpu_custom_call.1} parent=1 // pred_check
      _
    $region27: #{tpu_custom_call.1} parent=1 // pred_check_branch
      %26 = sbr.rel (0) target = $region29
    $region28: #{tpu_custom_call.1} parent=1 // pred_region
      _
    $region29: #{tpu_custom_call.1} parent=1 // pred_fallthru
      _
    %v27 = vld [vmem:[%s0] sm:$0xff]
    %v28 = vld [vmem:[%s0 + $0x8] sm:$0xff]
    %v29 = vld [vmem:[%s0 + $0x10] sm:$0xff]
    %v30 = vld [vmem:[%s0 + $0x18] sm:$0xff]
    %v31 = vld [vmem:[%s0 + $0x20] sm:$0xff]
    %v32 = vld [vmem:[%s0 + $0x28] sm:$0xff]
    %v33 = vld [vmem:[%s0 + $0x30] sm:$0xff]
    %v34 = vld [vmem:[%s0 + $0x38] sm:$0xff]
    %v35 = vld [vmem:[%s0 + $0x40] sm:$0xff]
    %v36 = vld [vmem:[%s0 + $0x48] sm:$0xff]
    %v37 = vld [vmem:[%s0 + $0x50] sm:$0xff]
    %v38 = vld [vmem:[%s0 + $0x58] sm:$0xff]
    %v39 = vld [vmem:[%s0 + $0x60] sm:$0xff]
    %v40 = vld [vmem:[%s0 + $0x68] sm:$0xff]
    %v41 = vld [vmem:[%s0 + $0x70] sm:$0xff]
    %v42 = vld [vmem:[%s0 + $0x78] sm:$0xff]
    %v43 = vld [vmem:[%s1] sm:$0xff]
    %v44 = vld [vmem:[%s1 + $0x8] sm:$0xff]
    %v45 = vld [vmem:[%s1 + $0x10] sm:$0xff]
    %v46 = vld [vmem:[%s1 + $0x18] sm:$0xff]
    %v47 = vld [vmem:[%s1 + $0x20] sm:$0xff]
    %v48 = vld [vmem:[%s1 + $0x28] sm:$0xff]
    %v49 = vld [vmem:[%s2] sm:$0x1]
    %v51 = vperm.slane %v49, 0
    %vm53 = vcmask 392192
    %v55 = vsel %vm53, %v27, 0
    %v58 = vsel %vm53, %v28, 0
    %v61 = vsel %vm53, %v29, 0
    %v64 = vsel %vm53, %v30, 0
    %v67 = vsel %vm53, %v31, 0
    %v70 = vsel %vm53, %v32, 0
    %v73 = vsel %vm53, %v33, 0
    %v76 = vsel %vm53, %v34, 0
    %v79 = vsel %vm53, %v35, 0
    %v82 = vsel %vm53, %v36, 0
    %v85 = vsel %vm53, %v37, 0
    %v88 = vsel %vm53, %v38, 0
    %v91 = vsel %vm53, %v39, 0
    %v94 = vsel %vm53, %v40, 0
    %v97 = vsel %vm53, %v41, 0
    %v100 = vsel %vm53, %v42, 0
    %102 = vmatpush.msra.mxu0 0.0
    %103 = vmatpush.msra.mxu0 0.0
    %104 = vmatpush.msra.mxu0 0.0
    %105 = vmatpush.msra.mxu0 0.0
    %106 = vmatpush.msra.mxu0 0.0
    %107 = vmatpush.msra.mxu0 0.0
    %108 = vmatpush.msra.mxu0 0.0
    %109 = vmatpush.msra.mxu0 0.0
    %110 = vmatpush.msra.mxu0 0.0
    %111 = vmatpush.msra.mxu0 0.0
    %112 = vmatpush.msra.mxu0 %v48
    %113 = vmatpush.msra.mxu0 %v47
    %114 = vmatpush.msra.mxu0 %v46
    %115 = vmatpush.msra.mxu0 %v45
    %116 = vmatpush.msra.mxu0 %v44
    %117 = vmatpush.msra.mxu0 %v43
    %118 = vmatmul.f32.gmra.mxu0 %v55
    %v119 = vpop.f32.mrf.mxu0
    %v120 = vadd.f32 %v51, %v119
    %121 = vmatmul.f32.gmra.mxu0 %v58
    %v122 = vpop.f32.mrf.mxu0
    %v123 = vadd.f32 %v51, %v122
    %124 = vmatmul.f32.gmra.mxu0 %v61
    %v125 = vpop.f32.mrf.mxu0
    %v126 = vadd.f32 %v51, %v125
    %127 = vmatmul.f32.gmra.mxu0 %v64
    %v128 = vpop.f32.mrf.mxu0
    %v129 = vadd.f32 %v51, %v128
    %130 = vmatmul.f32.gmra.mxu0 %v67
    %v131 = vpop.f32.mrf.mxu0
    %v132 = vadd.f32 %v51, %v131
    %133 = vmatmul.f32.gmra.mxu0 %v70
    %v134 = vpop.f32.mrf.mxu0
    %v135 = vadd.f32 %v51, %v134
    %136 = vmatmul.f32.gmra.mxu0 %v73
    %v137 = vpop.f32.mrf.mxu0
    %v138 = vadd.f32 %v51, %v137
    %139 = vmatmul.f32.gmra.mxu0 %v76
    %v140 = vpop.f32.mrf.mxu0
    %v141 = vadd.f32 %v51, %v140
    %142 = vmatmul.f32.gmra.mxu0 %v79
    %v143 = vpop.f32.mrf.mxu0
    %v144 = vadd.f32 %v51, %v143
    %145 = vmatmul.f32.gmra.mxu0 %v82
    %v146 = vpop.f32.mrf.mxu0
    %v147 = vadd.f32 %v51, %v146
    %148 = vmatmul.f32.gmra.mxu0 %v85
    %v149 = vpop.f32.mrf.mxu0
    %v150 = vadd.f32 %v51, %v149
    %151 = vmatmul.f32.gmra.mxu0 %v88
    %v152 = vpop.f32.mrf.mxu0
    %v153 = vadd.f32 %v51, %v152
    %154 = vmatmul.f32.gmra.mxu0 %v91
    %v155 = vpop.f32.mrf.mxu0
    %v156 = vadd.f32 %v51, %v155
    %157 = vmatmul.f32.gmra.mxu0 %v94
    %v158 = vpop.f32.mrf.mxu0
    %v159 = vadd.f32 %v51, %v158
    %160 = vmatmul.f32.gmra.mxu0 %v97
    %v161 = vpop.f32.mrf.mxu0
    %v162 = vadd.f32 %v51, %v161
    %163 = vmatmul.f32.gmra.mxu0 %v100
    %v164 = vpop.f32.mrf.mxu0
    %v165 = vadd.f32 %v51, %v164
    %166 = vdwg.mxu0
    %v167 = vmax.f32 %v120, 0.0
    %v168 = vmax.f32 %v123, 0.0
    %v169 = vmax.f32 %v126, 0.0
    %v170 = vmax.f32 %v129, 0.0
    %v171 = vmax.f32 %v132, 0.0
    %v172 = vmax.f32 %v135, 0.0
    %v173 = vmax.f32 %v138, 0.0
    %v174 = vmax.f32 %v141, 0.0
    %v175 = vmax.f32 %v144, 0.0
    %v176 = vmax.f32 %v147, 0.0
    %v177 = vmax.f32 %v150, 0.0
    %v178 = vmax.f32 %v153, 0.0
    %v179 = vmax.f32 %v156, 0.0
    %v180 = vmax.f32 %v159, 0.0
    %v181 = vmax.f32 %v162, 0.0
    %v182 = vmax.f32 %v165, 0.0
    %v199 = vrot.slane %v167, 2
    %v200 = vrot.slane %v167, 4
    %v201 = vrot.slane %v167, 6
    %v202 = vrot.slane %v168, 2
    %v203 = vrot.slane %v168, 4
    %v204 = vrot.slane %v168, 6
    %v205 = vrot.slane %v169, 2
    %v206 = vrot.slane %v169, 4
    %v207 = vrot.slane %v169, 6
    %v208 = vrot.slane %v170, 2
    %v209 = vrot.slane %v170, 4
    %v210 = vrot.slane %v170, 6
    %v211 = vrot.slane %v171, 2
    %v212 = vrot.slane %v171, 4
    %v213 = vrot.slane %v171, 6
    %v214 = vrot.slane %v172, 2
    %v215 = vrot.slane %v172, 4
    %v216 = vrot.slane %v172, 6
    %v217 = vrot.slane %v173, 2
    %v218 = vrot.slane %v173, 4
    %v219 = vrot.slane %v173, 6
    %v220 = vrot.slane %v174, 2
    %v221 = vrot.slane %v174, 4
    %v222 = vrot.slane %v174, 6
    %v223 = vrot.slane %v175, 2
    %v224 = vrot.slane %v175, 4
    %v225 = vrot.slane %v175, 6
    %v226 = vrot.slane %v176, 2
    %v227 = vrot.slane %v176, 4
    %v228 = vrot.slane %v176, 6
    %v229 = vrot.slane %v177, 2
    %v230 = vrot.slane %v177, 4
    %v231 = vrot.slane %v177, 6
    %v232 = vrot.slane %v178, 2
    %v233 = vrot.slane %v178, 4
    %v234 = vrot.slane %v178, 6
    %v235 = vrot.slane %v179, 2
    %v236 = vrot.slane %v179, 4
    %v237 = vrot.slane %v179, 6
    %v238 = vrot.slane %v180, 2
    %v239 = vrot.slane %v180, 4
    %v240 = vrot.slane %v180, 6
    %v241 = vrot.slane %v181, 2
    %v242 = vrot.slane %v181, 4
    %v243 = vrot.slane %v181, 6
    %v244 = vrot.slane %v182, 2
    %v245 = vrot.slane %v182, 4
    %v246 = vrot.slane %v182, 6
    %vm295 = vcmask 254976
    %v296 = vsel %vm295, %v167, -inf
    %v297 = vrot.slane %v296, 4
    %v298 = vmax.f32 %v296, %v297
    %v299 = vrot.slane %v298, 2
    %v300 = vmax.f32 %v298, %v299
    %v301 = vrot.slane %v300, 1
    %v302 = vmax.f32 %v300, %v301
    %v303 = vsel %vm295, %v199, -inf
    %v304 = vrot.slane %v303, 4
    %v305 = vmax.f32 %v303, %v304
    %v306 = vrot.slane %v305, 2
    %v307 = vmax.f32 %v305, %v306
    %v308 = vrot.slane %v307, 1
    %v309 = vmax.f32 %v307, %v308
    %v310 = vsel %vm295, %v200, -inf
    %v311 = vrot.slane %v310, 4
    %v312 = vmax.f32 %v310, %v311
    %v313 = vrot.slane %v312, 2
    %v314 = vmax.f32 %v312, %v313
    %v315 = vrot.slane %v314, 1
    %v316 = vmax.f32 %v314, %v315
    %v317 = vsel %vm295, %v201, -inf
    %v318 = vrot.slane %v317, 4
    %v319 = vmax.f32 %v317, %v318
    %v320 = vrot.slane %v319, 2
    %v321 = vmax.f32 %v319, %v320
    %v322 = vrot.slane %v321, 1
    %v323 = vmax.f32 %v321, %v322
    %v324 = vsel %vm295, %v168, -inf
    %v325 = vrot.slane %v324, 4
    %v326 = vmax.f32 %v324, %v325
    %v327 = vrot.slane %v326, 2
    %v328 = vmax.f32 %v326, %v327
    %v329 = vrot.slane %v328, 1
    %v330 = vmax.f32 %v328, %v329
    %v331 = vsel %vm295, %v202, -inf
    %v332 = vrot.slane %v331, 4
    %v333 = vmax.f32 %v331, %v332
    %v334 = vrot.slane %v333, 2
    %v335 = vmax.f32 %v333, %v334
    %v336 = vrot.slane %v335, 1
    %v337 = vmax.f32 %v335, %v336
    %v338 = vsel %vm295, %v203, -inf
    %v339 = vrot.slane %v338, 4
    %v340 = vmax.f32 %v338, %v339
    %v341 = vrot.slane %v340, 2
    %v342 = vmax.f32 %v340, %v341
    %v343 = vrot.slane %v342, 1
    %v344 = vmax.f32 %v342, %v343
    %v345 = vsel %vm295, %v204, -inf
    %v346 = vrot.slane %v345, 4
    %v347 = vmax.f32 %v345, %v346
    %v348 = vrot.slane %v347, 2
    %v349 = vmax.f32 %v347, %v348
    %v350 = vrot.slane %v349, 1
    %v351 = vmax.f32 %v349, %v350
    %v352 = vsel %vm295, %v169, -inf
    %v353 = vrot.slane %v352, 4
    %v354 = vmax.f32 %v352, %v353
    %v355 = vrot.slane %v354, 2
    %v356 = vmax.f32 %v354, %v355
    %v357 = vrot.slane %v356, 1
    %v358 = vmax.f32 %v356, %v357
    %v359 = vsel %vm295, %v205, -inf
    %v360 = vrot.slane %v359, 4
    %v361 = vmax.f32 %v359, %v360
    %v362 = vrot.slane %v361, 2
    %v363 = vmax.f32 %v361, %v362
    %v364 = vrot.slane %v363, 1
    %v365 = vmax.f32 %v363, %v364
    %v366 = vsel %vm295, %v206, -inf
    %v367 = vrot.slane %v366, 4
    %v368 = vmax.f32 %v366, %v367
    %v369 = vrot.slane %v368, 2
    %v370 = vmax.f32 %v368, %v369
    %v371 = vrot.slane %v370, 1
    %v372 = vmax.f32 %v370, %v371
    %v373 = vsel %vm295, %v207, -inf
    %v374 = vrot.slane %v373, 4
    %v375 = vmax.f32 %v373, %v374
    %v376 = vrot.slane %v375, 2
    %v377 = vmax.f32 %v375, %v376
    %v378 = vrot.slane %v377, 1
    %v379 = vmax.f32 %v377, %v378
    %v380 = vsel %vm295, %v170, -inf
    %v381 = vrot.slane %v380, 4
    %v382 = vmax.f32 %v380, %v381
    %v383 = vrot.slane %v382, 2
    %v384 = vmax.f32 %v382, %v383
    %v385 = vrot.slane %v384, 1
    %v386 = vmax.f32 %v384, %v385
    %v387 = vsel %vm295, %v208, -inf
    %v388 = vrot.slane %v387, 4
    %v389 = vmax.f32 %v387, %v388
    %v390 = vrot.slane %v389, 2
    %v391 = vmax.f32 %v389, %v390
    %v392 = vrot.slane %v391, 1
    %v393 = vmax.f32 %v391, %v392
    %v394 = vsel %vm295, %v209, -inf
    %v395 = vrot.slane %v394, 4
    %v396 = vmax.f32 %v394, %v395
    %v397 = vrot.slane %v396, 2
    %v398 = vmax.f32 %v396, %v397
    %v399 = vrot.slane %v398, 1
    %v400 = vmax.f32 %v398, %v399
    %v401 = vsel %vm295, %v210, -inf
    %v402 = vrot.slane %v401, 4
    %v403 = vmax.f32 %v401, %v402
    %v404 = vrot.slane %v403, 2
    %v405 = vmax.f32 %v403, %v404
    %v406 = vrot.slane %v405, 1
    %v407 = vmax.f32 %v405, %v406
    %v408 = vsel %vm295, %v171, -inf
    %v409 = vrot.slane %v408, 4
    %v410 = vmax.f32 %v408, %v409
    %v411 = vrot.slane %v410, 2
    %v412 = vmax.f32 %v410, %v411
    %v413 = vrot.slane %v412, 1
    %v414 = vmax.f32 %v412, %v413
    %v415 = vsel %vm295, %v211, -inf
    %v416 = vrot.slane %v415, 4
    %v417 = vmax.f32 %v415, %v416
    %v418 = vrot.slane %v417, 2
    %v419 = vmax.f32 %v417, %v418
    %v420 = vrot.slane %v419, 1
    %v421 = vmax.f32 %v419, %v420
    %v422 = vsel %vm295, %v212, -inf
    %v423 = vrot.slane %v422, 4
    %v424 = vmax.f32 %v422, %v423
    %v425 = vrot.slane %v424, 2
    %v426 = vmax.f32 %v424, %v425
    %v427 = vrot.slane %v426, 1
    %v428 = vmax.f32 %v426, %v427
    %v429 = vsel %vm295, %v213, -inf
    %v430 = vrot.slane %v429, 4
    %v431 = vmax.f32 %v429, %v430
    %v432 = vrot.slane %v431, 2
    %v433 = vmax.f32 %v431, %v432
    %v434 = vrot.slane %v433, 1
    %v435 = vmax.f32 %v433, %v434
    %v436 = vsel %vm295, %v172, -inf
    %v437 = vrot.slane %v436, 4
    %v438 = vmax.f32 %v436, %v437
    %v439 = vrot.slane %v438, 2
    %v440 = vmax.f32 %v438, %v439
    %v441 = vrot.slane %v440, 1
    %v442 = vmax.f32 %v440, %v441
    %v443 = vsel %vm295, %v214, -inf
    %v444 = vrot.slane %v443, 4
    %v445 = vmax.f32 %v443, %v444
    %v446 = vrot.slane %v445, 2
    %v447 = vmax.f32 %v445, %v446
    %v448 = vrot.slane %v447, 1
    %v449 = vmax.f32 %v447, %v448
    %v450 = vsel %vm295, %v215, -inf
    %v451 = vrot.slane %v450, 4
    %v452 = vmax.f32 %v450, %v451
    %v453 = vrot.slane %v452, 2
    %v454 = vmax.f32 %v452, %v453
    %v455 = vrot.slane %v454, 1
    %v456 = vmax.f32 %v454, %v455
    %v457 = vsel %vm295, %v216, -inf
    %v458 = vrot.slane %v457, 4
    %v459 = vmax.f32 %v457, %v458
    %v460 = vrot.slane %v459, 2
    %v461 = vmax.f32 %v459, %v460
    %v462 = vrot.slane %v461, 1
    %v463 = vmax.f32 %v461, %v462
    %v464 = vsel %vm295, %v173, -inf
    %v465 = vrot.slane %v464, 4
    %v466 = vmax.f32 %v464, %v465
    %v467 = vrot.slane %v466, 2
    %v468 = vmax.f32 %v466, %v467
    %v469 = vrot.slane %v468, 1
    %v470 = vmax.f32 %v468, %v469
    %v471 = vsel %vm295, %v217, -inf
    %v472 = vrot.slane %v471, 4
    %v473 = vmax.f32 %v471, %v472
    %v474 = vrot.slane %v473, 2
    %v475 = vmax.f32 %v473, %v474
    %v476 = vrot.slane %v475, 1
    %v477 = vmax.f32 %v475, %v476
    %v478 = vsel %vm295, %v218, -inf
    %v479 = vrot.slane %v478, 4
    %v480 = vmax.f32 %v478, %v479
    %v481 = vrot.slane %v480, 2
    %v482 = vmax.f32 %v480, %v481
    %v483 = vrot.slane %v482, 1
    %v484 = vmax.f32 %v482, %v483
    %v485 = vsel %vm295, %v219, -inf
    %v486 = vrot.slane %v485, 4
    %v487 = vmax.f32 %v485, %v486
    %v488 = vrot.slane %v487, 2
    %v489 = vmax.f32 %v487, %v488
    %v490 = vrot.slane %v489, 1
    %v491 = vmax.f32 %v489, %v490
    %v492 = vsel %vm295, %v174, -inf
    %v493 = vrot.slane %v492, 4
    %v494 = vmax.f32 %v492, %v493
    %v495 = vrot.slane %v494, 2
    %v496 = vmax.f32 %v494, %v495
    %v497 = vrot.slane %v496, 1
    %v498 = vmax.f32 %v496, %v497
    %v499 = vsel %vm295, %v220, -inf
    %v500 = vrot.slane %v499, 4
    %v501 = vmax.f32 %v499, %v500
    %v502 = vrot.slane %v501, 2
    %v503 = vmax.f32 %v501, %v502
    %v504 = vrot.slane %v503, 1
    %v505 = vmax.f32 %v503, %v504
    %v506 = vsel %vm295, %v221, -inf
    %v507 = vrot.slane %v506, 4
    %v508 = vmax.f32 %v506, %v507
    %v509 = vrot.slane %v508, 2
    %v510 = vmax.f32 %v508, %v509
    %v511 = vrot.slane %v510, 1
    %v512 = vmax.f32 %v510, %v511
    %v513 = vsel %vm295, %v222, -inf
    %v514 = vrot.slane %v513, 4
    %v515 = vmax.f32 %v513, %v514
    %v516 = vrot.slane %v515, 2
    %v517 = vmax.f32 %v515, %v516
    %v518 = vrot.slane %v517, 1
    %v519 = vmax.f32 %v517, %v518
    %v520 = vsel %vm295, %v175, -inf
    %v521 = vrot.slane %v520, 4
    %v522 = vmax.f32 %v520, %v521
    %v523 = vrot.slane %v522, 2
    %v524 = vmax.f32 %v522, %v523
    %v525 = vrot.slane %v524, 1
    %v526 = vmax.f32 %v524, %v525
    %v527 = vsel %vm295, %v223, -inf
    %v528 = vrot.slane %v527, 4
    %v529 = vmax.f32 %v527, %v528
    %v530 = vrot.slane %v529, 2
    %v531 = vmax.f32 %v529, %v530
    %v532 = vrot.slane %v531, 1
    %v533 = vmax.f32 %v531, %v532
    %v534 = vsel %vm295, %v224, -inf
    %v535 = vrot.slane %v534, 4
    %v536 = vmax.f32 %v534, %v535
    %v537 = vrot.slane %v536, 2
    %v538 = vmax.f32 %v536, %v537
    %v539 = vrot.slane %v538, 1
    %v540 = vmax.f32 %v538, %v539
    %v541 = vsel %vm295, %v225, -inf
    %v542 = vrot.slane %v541, 4
    %v543 = vmax.f32 %v541, %v542
    %v544 = vrot.slane %v543, 2
    %v545 = vmax.f32 %v543, %v544
    %v546 = vrot.slane %v545, 1
    %v547 = vmax.f32 %v545, %v546
    %v548 = vsel %vm295, %v176, -inf
    %v549 = vrot.slane %v548, 4
    %v550 = vmax.f32 %v548, %v549
    %v551 = vrot.slane %v550, 2
    %v552 = vmax.f32 %v550, %v551
    %v553 = vrot.slane %v552, 1
    %v554 = vmax.f32 %v552, %v553
    %v555 = vsel %vm295, %v226, -inf
    %v556 = vrot.slane %v555, 4
    %v557 = vmax.f32 %v555, %v556
    %v558 = vrot.slane %v557, 2
    %v559 = vmax.f32 %v557, %v558
    %v560 = vrot.slane %v559, 1
    %v561 = vmax.f32 %v559, %v560
    %v562 = vsel %vm295, %v227, -inf
    %v563 = vrot.slane %v562, 4
    %v564 = vmax.f32 %v562, %v563
    %v565 = vrot.slane %v564, 2
    %v566 = vmax.f32 %v564, %v565
    %v567 = vrot.slane %v566, 1
    %v568 = vmax.f32 %v566, %v567
    %v569 = vsel %vm295, %v228, -inf
    %v570 = vrot.slane %v569, 4
    %v571 = vmax.f32 %v569, %v570
    %v572 = vrot.slane %v571, 2
    %v573 = vmax.f32 %v571, %v572
    %v574 = vrot.slane %v573, 1
    %v575 = vmax.f32 %v573, %v574
    %v576 = vsel %vm295, %v177, -inf
    %v577 = vrot.slane %v576, 4
    %v578 = vmax.f32 %v576, %v577
    %v579 = vrot.slane %v578, 2
    %v580 = vmax.f32 %v578, %v579
    %v581 = vrot.slane %v580, 1
    %v582 = vmax.f32 %v580, %v581
    %v583 = vsel %vm295, %v229, -inf
    %v584 = vrot.slane %v583, 4
    %v585 = vmax.f32 %v583, %v584
    %v586 = vrot.slane %v585, 2
    %v587 = vmax.f32 %v585, %v586
    %v588 = vrot.slane %v587, 1
    %v589 = vmax.f32 %v587, %v588
    %v590 = vsel %vm295, %v230, -inf
    %v591 = vrot.slane %v590, 4
    %v592 = vmax.f32 %v590, %v591
    %v593 = vrot.slane %v592, 2
    %v594 = vmax.f32 %v592, %v593
    %v595 = vrot.slane %v594, 1
    %v596 = vmax.f32 %v594, %v595
    %v597 = vsel %vm295, %v231, -inf
    %v598 = vrot.slane %v597, 4
    %v599 = vmax.f32 %v597, %v598
    %v600 = vrot.slane %v599, 2
    %v601 = vmax.f32 %v599, %v600
    %v602 = vrot.slane %v601, 1
    %v603 = vmax.f32 %v601, %v602
    %v604 = vsel %vm295, %v178, -inf
    %v605 = vrot.slane %v604, 4
    %v606 = vmax.f32 %v604, %v605
    %v607 = vrot.slane %v606, 2
    %v608 = vmax.f32 %v606, %v607
    %v609 = vrot.slane %v608, 1
    %v610 = vmax.f32 %v608, %v609
    %v611 = vsel %vm295, %v232, -inf
    %v612 = vrot.slane %v611, 4
    %v613 = vmax.f32 %v611, %v612
    %v614 = vrot.slane %v613, 2
    %v615 = vmax.f32 %v613, %v614
    %v616 = vrot.slane %v615, 1
    %v617 = vmax.f32 %v615, %v616
    %v618 = vsel %vm295, %v233, -inf
    %v619 = vrot.slane %v618, 4
    %v620 = vmax.f32 %v618, %v619
    %v621 = vrot.slane %v620, 2
    %v622 = vmax.f32 %v620, %v621
    %v623 = vrot.slane %v622, 1
    %v624 = vmax.f32 %v622, %v623
    %v625 = vsel %vm295, %v234, -inf
    %v626 = vrot.slane %v625, 4
    %v627 = vmax.f32 %v625, %v626
    %v628 = vrot.slane %v627, 2
    %v629 = vmax.f32 %v627, %v628
    %v630 = vrot.slane %v629, 1
    %v631 = vmax.f32 %v629, %v630
    %v632 = vsel %vm295, %v179, -inf
    %v633 = vrot.slane %v632, 4
    %v634 = vmax.f32 %v632, %v633
    %v635 = vrot.slane %v634, 2
    %v636 = vmax.f32 %v634, %v635
    %v637 = vrot.slane %v636, 1
    %v638 = vmax.f32 %v636, %v637
    %v639 = vsel %vm295, %v235, -inf
    %v640 = vrot.slane %v639, 4
    %v641 = vmax.f32 %v639, %v640
    %v642 = vrot.slane %v641, 2
    %v643 = vmax.f32 %v641, %v642
    %v644 = vrot.slane %v643, 1
    %v645 = vmax.f32 %v643, %v644
    %v646 = vsel %vm295, %v236, -inf
    %v647 = vrot.slane %v646, 4
    %v648 = vmax.f32 %v646, %v647
    %v649 = vrot.slane %v648, 2
    %v650 = vmax.f32 %v648, %v649
    %v651 = vrot.slane %v650, 1
    %v652 = vmax.f32 %v650, %v651
    %v653 = vsel %vm295, %v237, -inf
    %v654 = vrot.slane %v653, 4
    %v655 = vmax.f32 %v653, %v654
    %v656 = vrot.slane %v655, 2
    %v657 = vmax.f32 %v655, %v656
    %v658 = vrot.slane %v657, 1
    %v659 = vmax.f32 %v657, %v658
    %v660 = vsel %vm295, %v180, -inf
    %v661 = vrot.slane %v660, 4
    %v662 = vmax.f32 %v660, %v661
    %v663 = vrot.slane %v662, 2
    %v664 = vmax.f32 %v662, %v663
    %v665 = vrot.slane %v664, 1
    %v666 = vmax.f32 %v664, %v665
    %v667 = vsel %vm295, %v238, -inf
    %v668 = vrot.slane %v667, 4
    %v669 = vmax.f32 %v667, %v668
    %v670 = vrot.slane %v669, 2
    %v671 = vmax.f32 %v669, %v670
    %v672 = vrot.slane %v671, 1
    %v673 = vmax.f32 %v671, %v672
    %v674 = vsel %vm295, %v239, -inf
    %v675 = vrot.slane %v674, 4
    %v676 = vmax.f32 %v674, %v675
    %v677 = vrot.slane %v676, 2
    %v678 = vmax.f32 %v676, %v677
    %v679 = vrot.slane %v678, 1
    %v680 = vmax.f32 %v678, %v679
    %v681 = vsel %vm295, %v240, -inf
    %v682 = vrot.slane %v681, 4
    %v683 = vmax.f32 %v681, %v682
    %v684 = vrot.slane %v683, 2
    %v685 = vmax.f32 %v683, %v684
    %v686 = vrot.slane %v685, 1
    %v687 = vmax.f32 %v685, %v686
    %v688 = vsel %vm295, %v181, -inf
    %v689 = vrot.slane %v688, 4
    %v690 = vmax.f32 %v688, %v689
    %v691 = vrot.slane %v690, 2
    %v692 = vmax.f32 %v690, %v691
    %v693 = vrot.slane %v692, 1
    %v694 = vmax.f32 %v692, %v693
    %v695 = vsel %vm295, %v241, -inf
    %v696 = vrot.slane %v695, 4
    %v697 = vmax.f32 %v695, %v696
    %v698 = vrot.slane %v697, 2
    %v699 = vmax.f32 %v697, %v698
    %v700 = vrot.slane %v699, 1
    %v701 = vmax.f32 %v699, %v700
    %v702 = vsel %vm295, %v242, -inf
    %v703 = vrot.slane %v702, 4
    %v704 = vmax.f32 %v702, %v703
    %v705 = vrot.slane %v704, 2
    %v706 = vmax.f32 %v704, %v705
    %v707 = vrot.slane %v706, 1
    %v708 = vmax.f32 %v706, %v707
    %v709 = vsel %vm295, %v243, -inf
    %v710 = vrot.slane %v709, 4
    %v711 = vmax.f32 %v709, %v710
    %v712 = vrot.slane %v711, 2
    %v713 = vmax.f32 %v711, %v712
    %v714 = vrot.slane %v713, 1
    %v715 = vmax.f32 %v713, %v714
    %v716 = vsel %vm295, %v182, -inf
    %v717 = vrot.slane %v716, 4
    %v718 = vmax.f32 %v716, %v717
    %v719 = vrot.slane %v718, 2
    %v720 = vmax.f32 %v718, %v719
    %v721 = vrot.slane %v720, 1
    %v722 = vmax.f32 %v720, %v721
    %v723 = vsel %vm295, %v244, -inf
    %v724 = vrot.slane %v723, 4
    %v725 = vmax.f32 %v723, %v724
    %v726 = vrot.slane %v725, 2
    %v727 = vmax.f32 %v725, %v726
    %v728 = vrot.slane %v727, 1
    %v729 = vmax.f32 %v727, %v728
    %v730 = vsel %vm295, %v245, -inf
    %v731 = vrot.slane %v730, 4
    %v732 = vmax.f32 %v730, %v731
    %v733 = vrot.slane %v732, 2
    %v734 = vmax.f32 %v732, %v733
    %v735 = vrot.slane %v734, 1
    %v736 = vmax.f32 %v734, %v735
    %v737 = vsel %vm295, %v246, -inf
    %v738 = vrot.slane %v737, 4
    %v739 = vmax.f32 %v737, %v738
    %v740 = vrot.slane %v739, 2
    %v741 = vmax.f32 %v739, %v740
    %v742 = vrot.slane %v741, 1
    %v743 = vmax.f32 %v741, %v742
    %vm808 = vcmask 1041409
    %v809 = vsel %vm808, %v309, %v302
    %vm810 = vcmask 1042434
    %v811 = vsel %vm810, %v316, %v809
    %vm812 = vcmask 1043459
    %v813 = vsel %vm812, %v323, %v811
    %vm814 = vcmask 1044484
    %v815 = vsel %vm814, %v330, %v813
    %vm816 = vcmask 1045509
    %v817 = vsel %vm816, %v337, %v815
    %vm818 = vcmask 1046534
    %v819 = vsel %vm818, %v344, %v817
    %vm820 = vcmask 1047559
    %v821 = vsel %vm820, %v351, %v819
    %v822 = vsel %vm808, %v365, %v358
    %v823 = vsel %vm810, %v372, %v822
    %v824 = vsel %vm812, %v379, %v823
    %v825 = vsel %vm814, %v386, %v824
    %v826 = vsel %vm816, %v393, %v825
    %v827 = vsel %vm818, %v400, %v826
    %v828 = vsel %vm820, %v407, %v827
    %v829 = vsel %vm808, %v421, %v414
    %v830 = vsel %vm810, %v428, %v829
    %v831 = vsel %vm812, %v435, %v830
    %v832 = vsel %vm814, %v442, %v831
    %v833 = vsel %vm816, %v449, %v832
    %v834 = vsel %vm818, %v456, %v833
    %v835 = vsel %vm820, %v463, %v834
    %v836 = vsel %vm808, %v477, %v470
    %v837 = vsel %vm810, %v484, %v836
    %v838 = vsel %vm812, %v491, %v837
    %v839 = vsel %vm814, %v498, %v838
    %v840 = vsel %vm816, %v505, %v839
    %v841 = vsel %vm818, %v512, %v840
    %v842 = vsel %vm820, %v519, %v841
    %v843 = vsel %vm808, %v533, %v526
    %v844 = vsel %vm810, %v540, %v843
    %v845 = vsel %vm812, %v547, %v844
    %v846 = vsel %vm814, %v554, %v845
    %v847 = vsel %vm816, %v561, %v846
    %v848 = vsel %vm818, %v568, %v847
    %v849 = vsel %vm820, %v575, %v848
    %v850 = vsel %vm808, %v589, %v582
    %v851 = vsel %vm810, %v596, %v850
    %v852 = vsel %vm812, %v603, %v851
    %v853 = vsel %vm814, %v610, %v852
    %v854 = vsel %vm816, %v617, %v853
    %v855 = vsel %vm818, %v624, %v854
    %v856 = vsel %vm820, %v631, %v855
    %v857 = vsel %vm808, %v645, %v638
    %v858 = vsel %vm810, %v652, %v857
    %v859 = vsel %vm812, %v659, %v858
    %v860 = vsel %vm814, %v666, %v859
    %v861 = vsel %vm816, %v673, %v860
    %v862 = vsel %vm818, %v680, %v861
    %v863 = vsel %vm820, %v687, %v862
    %v864 = vsel %vm808, %v701, %v694
    %v865 = vsel %vm810, %v708, %v864
    %v866 = vsel %vm812, %v715, %v865
    %v867 = vsel %vm814, %v722, %v866
    %v868 = vsel %vm816, %v729, %v867
    %v869 = vsel %vm818, %v736, %v868
    %v870 = vsel %vm820, %v743, %v869
    %v879 = vrot.slane %v835, 4
    %vm880 = vcmask 1047556
    %v881 = vsel %vm880, %v879, %v821
    %v882 = vrot.slane %v821, 4
    %v883 = vsel %vm880, %v835, %v882
    %v885 = vunpack.c.l.s4 1983009808
    %v886 = vunpack.c.0.s8 %v885
    %v887 = vperm.slane %v881, %v886
    %v889 = vunpack.c.l.s4 1983009808
    %v890 = vunpack.c.0.s8 %v889
    %v891 = vperm.slane %v883, %v890
    %v892 = vrot.slane %v842, 4
    %v893 = vsel %vm880, %v892, %v828
    %v894 = vrot.slane %v828, 4
    %v895 = vsel %vm880, %v842, %v894
    %v897 = vunpack.c.l.s4 1983009808
    %v898 = vunpack.c.0.s8 %v897
    %v899 = vperm.slane %v893, %v898
    %v901 = vunpack.c.l.s4 1983009808
    %v902 = vunpack.c.0.s8 %v901
    %v903 = vperm.slane %v895, %v902
    %v904 = vrot.slane %v863, 4
    %v905 = vsel %vm880, %v904, %v849
    %v906 = vrot.slane %v849, 4
    %v907 = vsel %vm880, %v863, %v906
    %v909 = vunpack.c.l.s4 1983009808
    %v910 = vunpack.c.0.s8 %v909
    %v911 = vperm.slane %v905, %v910
    %v913 = vunpack.c.l.s4 1983009808
    %v914 = vunpack.c.0.s8 %v913
    %v915 = vperm.slane %v907, %v914
    %v916 = vrot.slane %v870, 4
    %v917 = vsel %vm880, %v916, %v856
    %v918 = vrot.slane %v856, 4
    %v919 = vsel %vm880, %v870, %v918
    %v921 = vunpack.c.l.s4 1983009808
    %v922 = vunpack.c.0.s8 %v921
    %v923 = vperm.slane %v917, %v922
    %v925 = vunpack.c.l.s4 1983009808
    %v926 = vunpack.c.0.s8 %v925
    %v927 = vperm.slane %v919, %v926
    %v928 = vrot.slane %v899, 4
    %v929 = vsel %vm880, %v928, %v887
    %v930 = vrot.slane %v887, 4
    %v931 = vsel %vm880, %v899, %v930
    %v933 = vunpack.c.l.s4 1934713408
    %v934 = vunpack.c.0.s8 %v933
    %v935 = vperm.slane %v929, %v934
    %v937 = vunpack.c.l.s4 1934713408
    %v938 = vunpack.c.0.s8 %v937
    %v939 = vperm.slane %v931, %v938
    %v940 = vrot.slane %v903, 4
    %v941 = vsel %vm880, %v940, %v891
    %v942 = vrot.slane %v891, 4
    %v943 = vsel %vm880, %v903, %v942
    %v945 = vunpack.c.l.s4 1934713408
    %v946 = vunpack.c.0.s8 %v945
    %v947 = vperm.slane %v941, %v946
    %v949 = vunpack.c.l.s4 1934713408
    %v950 = vunpack.c.0.s8 %v949
    %v951 = vperm.slane %v943, %v950
    %v952 = vrot.slane %v923, 4
    %v953 = vsel %vm880, %v952, %v911
    %v954 = vrot.slane %v911, 4
    %v955 = vsel %vm880, %v923, %v954
    %v957 = vunpack.c.l.s4 1934713408
    %v958 = vunpack.c.0.s8 %v957
    %v959 = vperm.slane %v953, %v958
    %v961 = vunpack.c.l.s4 1934713408
    %v962 = vunpack.c.0.s8 %v961
    %v963 = vperm.slane %v955, %v962
    %v964 = vrot.slane %v927, 4
    %v965 = vsel %vm880, %v964, %v915
    %v966 = vrot.slane %v915, 4
    %v967 = vsel %vm880, %v927, %v966
    %v969 = vunpack.c.l.s4 1934713408
    %v970 = vunpack.c.0.s8 %v969
    %v971 = vperm.slane %v965, %v970
    %v973 = vunpack.c.l.s4 1934713408
    %v974 = vunpack.c.0.s8 %v973
    %v975 = vperm.slane %v967, %v974
    %v976 = vrot.slane %v959, 4
    %v977 = vsel %vm880, %v976, %v935
    %v978 = vrot.slane %v935, 4
    %v979 = vsel %vm880, %v959, %v978
    %v980 = vrot.slane %v963, 4
    %v981 = vsel %vm880, %v980, %v939
    %v982 = vrot.slane %v939, 4
    %v983 = vsel %vm880, %v963, %v982
    %v984 = vrot.slane %v971, 4
    %v985 = vsel %vm880, %v984, %v947
    %v986 = vrot.slane %v947, 4
    %v987 = vsel %vm880, %v971, %v986
    %v988 = vrot.slane %v975, 4
    %v989 = vsel %vm880, %v988, %v951
    %v990 = vrot.slane %v951, 4
    %v991 = vsel %vm880, %v975, %v990
    %993 = vrot.lane.b32.xlu0 %v979, 32
    %v994 = vpop.permute.xlu0 %993
    %997 = vrot.lane.b32.xlu0 %v981, 64
    %v998 = vpop.permute.xlu0 %997
    %1001 = vrot.lane.b32.xlu0 %v983, 96
    %v1002 = vpop.permute.xlu0 %1001
    %1005 = vrot.lane.b32.xlu0 %v987, 32
    %v1006 = vpop.permute.xlu0 %1005
    %1009 = vrot.lane.b32.xlu0 %v989, 64
    %v1010 = vpop.permute.xlu0 %1009
    %1013 = vrot.lane.b32.xlu0 %v991, 96
    %v1014 = vpop.permute.xlu0 %1013
    %vm1016 = vcmask 261120
    %v1017 = vsel %vm1016, %v977, %v994
    %vm1018 = vcmask 523264
    %v1019 = vsel %vm1018, %v1017, %v998
    %vm1020 = vcmask 785408
    %v1021 = vsel %vm1020, %v1019, %v1002
    %v1022 = vsel %vm1016, %v985, %v1006
    %v1023 = vsel %vm1018, %v1022, %v1010
    %v1024 = vsel %vm1020, %v1023, %v1014
    %v1025 = vld [vmem:[%s3] sm:$0xff]
    %v1026 = vld [vmem:[%s3 + $0x8] sm:$0xff]
    %v1027 = vld [vmem:[%s3 + $0x10] sm:$0xff]
    %v1028 = vld [vmem:[%s3 + $0x18] sm:$0xff]
    %v1029 = vld [vmem:[%s3 + $0x20] sm:$0xff]
    %v1030 = vld [vmem:[%s3 + $0x28] sm:$0xff]
    %v1031 = vld [vmem:[%s3 + $0x30] sm:$0xff]
    %v1032 = vld [vmem:[%s3 + $0x38] sm:$0xff]
    %v1033 = vld [vmem:[%s3 + $0x40] sm:$0xff]
    %v1034 = vld [vmem:[%s3 + $0x48] sm:$0xff]
    %v1035 = vld [vmem:[%s3 + $0x50] sm:$0xff]
    %v1036 = vld [vmem:[%s3 + $0x58] sm:$0xff]
    %v1037 = vld [vmem:[%s3 + $0x60] sm:$0xff]
    %v1038 = vld [vmem:[%s3 + $0x68] sm:$0xff]
    %v1039 = vld [vmem:[%s3 + $0x70] sm:$0xff]
    %v1040 = vld [vmem:[%s3 + $0x78] sm:$0xff]
    %v1041 = vld [vmem:[%s3 + $0x80] sm:$0xff]
    %v1042 = vld [vmem:[%s3 + $0x88] sm:$0xff]
    %v1043 = vld [vmem:[%s3 + $0x90] sm:$0xff]
    %v1044 = vld [vmem:[%s3 + $0x98] sm:$0xff]
    %v1045 = vld [vmem:[%s3 + $0xa0] sm:$0xff]
    %v1046 = vld [vmem:[%s3 + $0xa8] sm:$0xff]
    %v1047 = vld [vmem:[%s3 + $0xb0] sm:$0xff]
    %v1048 = vld [vmem:[%s3 + $0xb8] sm:$0xff]
    %v1049 = vld [vmem:[%s3 + $0xc0] sm:$0xff]
    %v1050 = vld [vmem:[%s3 + $0xc8] sm:$0xff]
    %v1051 = vld [vmem:[%s3 + $0xd0] sm:$0xff]
    %v1052 = vld [vmem:[%s3 + $0xd8] sm:$0xff]
    %v1053 = vld [vmem:[%s3 + $0xe0] sm:$0xff]
    %v1054 = vld [vmem:[%s3 + $0xe8] sm:$0xff]
    %v1055 = vld [vmem:[%s3 + $0xf0] sm:$0xff]
    %v1056 = vld [vmem:[%s3 + $0xf8] sm:$0xff]
    %v1057 = vld [vmem:[%s4] sm:$0x1]
    %v1059 = vperm.slane %v1057, 0
    %1061 = vmatpush.msra.mxu0 %v1040
    %1062 = vmatpush.msra.mxu0 %v1039
    %1063 = vmatpush.msra.mxu0 %v1038
    %1064 = vmatpush.msra.mxu0 %v1037
    %1065 = vmatpush.msra.mxu0 %v1036
    %1066 = vmatpush.msra.mxu0 %v1035
    %1067 = vmatpush.msra.mxu0 %v1034
    %1068 = vmatpush.msra.mxu0 %v1033
    %1069 = vmatpush.msra.mxu0 %v1032
    %1070 = vmatpush.msra.mxu0 %v1031
    %1071 = vmatpush.msra.mxu0 %v1030
    %1072 = vmatpush.msra.mxu0 %v1029
    %1073 = vmatpush.msra.mxu0 %v1028
    %1074 = vmatpush.msra.mxu0 %v1027
    %1075 = vmatpush.msra.mxu0 %v1026
    %1076 = vmatpush.msra.mxu0 %v1025
    %1077 = vmatmul.f32.gmra.mxu0 %v1021
    %v1078 = vpop.f32.mrf.mxu0
    %v1079 = vadd.f32 %v1059, %v1078
    %1080 = vdwg.mxu0
    %1081 = vmatpush.msra.mxu0 %v1056
    %1082 = vmatpush.msra.mxu0 %v1055
    %1083 = vmatpush.msra.mxu0 %v1054
    %1084 = vmatpush.msra.mxu0 %v1053
    %1085 = vmatpush.msra.mxu0 %v1052
    %1086 = vmatpush.msra.mxu0 %v1051
    %1087 = vmatpush.msra.mxu0 %v1050
    %1088 = vmatpush.msra.mxu0 %v1049
    %1089 = vmatpush.msra.mxu0 %v1048
    %1090 = vmatpush.msra.mxu0 %v1047
    %1091 = vmatpush.msra.mxu0 %v1046
    %1092 = vmatpush.msra.mxu0 %v1045
    %1093 = vmatpush.msra.mxu0 %v1044
    %1094 = vmatpush.msra.mxu0 %v1043
    %1095 = vmatpush.msra.mxu0 %v1042
    %1096 = vmatpush.msra.mxu0 %v1041
    %1097 = vmatmul.f32.gmra.mxu0 %v1024
    %v1098 = vpop.f32.mrf.mxu0
    %v1099 = vadd.f32 %v1079, %v1098
    %1100 = vdwg.mxu0
    %v1101 = vmax.f32 %v1099, 0.0
    %v1102 = vld [vmem:[%s5] sm:$0xff]
    %v1103 = vld [vmem:[%s5 + $0x8] sm:$0xff]
    %v1104 = vld [vmem:[%s5 + $0x10] sm:$0xff]
    %v1105 = vld [vmem:[%s5 + $0x18] sm:$0xff]
    %v1106 = vld [vmem:[%s6] sm:$0x1]
    %v1108 = vperm.slane %v1106, 0
    %v1111 = vsel %vm1016, %v1101, 0
    %1113 = vmatpush.msra.mxu0 0.0
    %1114 = vmatpush.msra.mxu0 0.0
    %1115 = vmatpush.msra.mxu0 0.0
    %1116 = vmatpush.msra.mxu0 0.0
    %1117 = vmatpush.msra.mxu0 0.0
    %1118 = vmatpush.msra.mxu0 0.0
    %1119 = vmatpush.msra.mxu0 0.0
    %1120 = vmatpush.msra.mxu0 0.0
    %1121 = vmatpush.msra.mxu0 0.0
    %1122 = vmatpush.msra.mxu0 0.0
    %1123 = vmatpush.msra.mxu0 0.0
    %1124 = vmatpush.msra.mxu0 0.0
    %1125 = vmatpush.msra.mxu0 %v1105
    %1126 = vmatpush.msra.mxu0 %v1104
    %1127 = vmatpush.msra.mxu0 %v1103
    %1128 = vmatpush.msra.mxu0 %v1102
    %1129 = vmatmul.f32.gmra.mxu0 %v1111
    %v1130 = vpop.f32.mrf.mxu0
    %v1131 = vadd.f32 %v1108, %v1130
    %1132 = vdwg.mxu0
    %1133 = vst [vmem:[#allocation2] sm:$0xff] %v1131
    // Predicated region
    $region30: #{tpu_custom_call.1} parent=1 // pred_check
      _
    $region31: #{tpu_custom_call.1} parent=1 // pred_check_branch
      %1135 = sbr.rel (0) target = $region33
    $region32: #{tpu_custom_call.1} parent=1 // pred_region
      %1137 = vsyncadd [#allocation3], 0
      %s1139 = sshll.u32 [#allocation2], 4
      %s1140 = int_to_ptr.vmem [resolvable:$true] %s1139
      %s1141 = sshll.u32 %s7, 4
      %s1142 = int_to_ptr.hbm [resolvable:$true] %s1141
      %1144 = dma.vmem_to_hbm [thread:$0]  %s1140, 128, %s1142, [#allocation3]
    $region33: #{tpu_custom_call.1} parent=1 // pred_fallthru
      _
    // Predicated region
    $region34: #{tpu_custom_call.1} parent=1 // pred_check
      _
    $region35: #{tpu_custom_call.1} parent=1 // pred_check_branch
      %1146 = sbr.rel (0) target = $region37
    $region36: #{tpu_custom_call.1} parent=1 // pred_region
      %1148 = dma.done [#allocation3], 128
    $region37: #{tpu_custom_call.1} parent=1 // pred_fallthru
      _
    %1149 = vsyncpa [#allocation3], 1

</llo_original>
